<compile_context>
chip_gen: v6e
topology: v6e:2x2x1
jax: 0.10.0
libtpu: 0.0.40
codegen_flags: <defaults>
</compile_context>

<pallas_src>
from functools import partial

import numpy as np
import jax
import jax.numpy as jnp
from jax.experimental import pallas as pl
from jax.experimental.pallas import tpu as pltpu


# ---------------------------------------------------------------------------
# Kernels
# ---------------------------------------------------------------------------

def _copy_shifted(x_ref, o_ref, n, s, f_lo, f_hi, dtype):
    """Zero-padded shift along the sequence (sublane) axis via static ref slices.

    Writes o_ref[0, :, f_lo:f_hi] = shift(x_ref[0, :, f_lo:f_hi], s).
    Everything is a static slice load/store -> pure copy work (no iota/roll/select).
    """
    width = f_hi - f_lo
    if s == 0:
        o_ref[0, :, f_lo:f_hi] = x_ref[0, :, f_lo:f_hi]
        return
    if abs(s) >= n:
        o_ref[0, :, f_lo:f_hi] = jnp.zeros((n, width), dtype)
        return
    if s > 0:
        o_ref[0, :s, f_lo:f_hi] = jnp.zeros((s, width), dtype)
        o_ref[0, s:, f_lo:f_hi] = x_ref[0, : n - s, f_lo:f_hi]
    else:
        k = -s
        o_ref[0, : n - k, f_lo:f_hi] = x_ref[0, k:, f_lo:f_hi]
        o_ref[0, n - k:, f_lo:f_hi] = jnp.zeros((k, width), dtype)


def _pre_shift_full_kernel(x_ref, o_ref, *, shifts, fps, n, d, dtype):
    """Fallback path: one batch element, full feature width per grid step."""
    segments = len(shifts)
    for i, s in enumerate(shifts):
        _copy_shifted(x_ref, o_ref, n, s, i * fps, (i + 1) * fps, dtype)
    if segments * fps < d:                      # leftover features pass through
        o_ref[0, :, segments * fps:] = x_ref[0, :, segments * fps:]


def _pre_shift_tile_kernel(shift_ref, x_ref, o_ref, *, unique_shifts, n, dt, dtype):
    """Fast path: one lane-aligned feature tile (exactly one segment/shift) per step."""
    t = pl.program_id(1)
    s_val = shift_ref[t]                        # scalar-prefetch SMEM lookup
    for s in unique_shifts:                     # small static set of shift values
        @pl.when(s_val == s)
        def _(s=s):
            _copy_shifted(x_ref, o_ref, n, s, 0, dt, dtype)


# ---------------------------------------------------------------------------
# Wrapper
# ---------------------------------------------------------------------------

def pre_shift_tokens(x, shifts, fn=lambda t: t, *, max_lane_tile=512):
    """JAX/Pallas equivalent of PreShiftTokens(shifts, fn)(x)."""
    shifts = tuple(int(s) for s in shifts)
    if shifts == (0,):
        return fn(x)

    B, N, D = x.shape
    segments = len(shifts)
    fps = D // segments
    if fps == 0:
        # Degenerate (D < len(shifts)): no full segment to shift; pass through.
        return fn(x)

    itemsize = np.dtype(x.dtype).itemsize
    rest = D - segments * fps

    if rest == 0 and fps % 128 == 0:
        # ---- fast path: lane-aligned segments -> feature-tiled grid ----------
        # Keep per-step VMEM (in + out, double-buffered) around <=16 MiB so the
        # pipeline stays double-buffered even under v7x's tighter VMEM.
        budget = 16 * 1024 * 1024
        dt_cap = max(128, budget // max(1, 4 * N * itemsize))
        max_tile = max(128, (min(max_lane_tile, dt_cap) // 128) * 128)
        dt = 128
        for k in range(max_tile // 128, 0, -1):
            if fps % (k * 128) == 0:            # tiles never straddle a segment
                dt = k * 128
                break
        n_tiles = D // dt
        shift_tbl = jnp.asarray(
            [shifts[(t * dt) // fps] for t in range(n_tiles)], jnp.int32)

        kernel = partial(_pre_shift_tile_kernel,
                         unique_shifts=tuple(sorted(set(shifts))),
                         n=N, dt=dt, dtype=x.dtype)
        shifted = pl.pallas_call(
            kernel,
            out_shape=jax.ShapeDtypeStruct((B, N, D), x.dtype),
            grid_spec=pltpu.PrefetchScalarGridSpec(
                num_scalar_prefetch=1,
                grid=(B, n_tiles),
                in_specs=[pl.BlockSpec((1, N, dt), lambda b, t, _s: (b, 0, t))],
                out_specs=pl.BlockSpec((1, N, dt), lambda b, t, _s: (b, 0, t)),
            ),
            compiler_params=pltpu.CompilerParams(
                dimension_semantics=("parallel", "parallel")),
        )(shift_tbl, x)
    else:
        # ---- fallback: whole (1, N, D) slab per batch element ----------------
        # TODO(synk): for very large N*D slabs, tile the sequence axis with a
        # |shift|-sized halo instead of raising the VMEM limit.
        kernel = partial(_pre_shift_full_kernel, shifts=shifts, fps=fps,
                         n=N, d=D, dtype=x.dtype)
        need = 4 * N * D * itemsize + (2 << 20)     # in+out, double-buffered
        cp_kwargs = dict(dimension_semantics=("parallel",))
        if need > (16 << 20):
            cp_kwargs["vmem_limit_bytes"] = int(min(need, 64 << 20))
        shifted = pl.pallas_call(
            kernel,
            out_shape=jax.ShapeDtypeStruct((B, N, D), x.dtype),
            grid=(B,),
            in_specs=[pl.BlockSpec((1, N, D), lambda b: (b, 0, 0))],
            out_specs=pl.BlockSpec((1, N, D), lambda b: (b, 0, 0)),
            compiler_params=pltpu.CompilerParams(**cp_kwargs),
        )(x)

    # TODO(synk): `fn` is an arbitrary wrapped module; applying it outside the kernel
    # costs one extra full HBM read+write of (B, N, D). Fuse it into this kernel (or
    # fuse the shift into the consumer) when fn is elementwise / a matmul to halve traffic.
    return fn(shifted)


# ---------------------------------------------------------------------------
# NumPy reference
# ---------------------------------------------------------------------------

def _ref_shift_np(t, amount):
    if amount == 0:
        return t
    out = np.zeros_like(t)
    if amount > 0:
        out[:, amount:, :] = t[:, :-amount, :]
    else:
        out[:, :amount, :] = t[:, -amount:, :]
    return out


def _ref_pre_shift_np(x, shifts):
    shifts = tuple(shifts)
    if shifts == (0,):
        return x
    segments = len(shifts)
    fps = x.shape[-1] // segments
    chunks = [x[..., i * fps:(i + 1) * fps] for i in range(segments)]
    rest = x[..., segments * fps:]
    shifted = [_ref_shift_np(c, s) for c, s in zip(chunks, shifts)]
    return np.concatenate(shifted + [rest], axis=-1)


if __name__ == "__main__":
    key = jax.random.PRNGKey(0)
    k1, k2 = jax.random.split(key)

    # Case 1: unaligned segments (D=32 -> 3 segments of 10 + 2 pass-through) -> fallback path.
    B, N, D = 2, 8, 32
    shifts = (0, 1, -1)
    x1 = jax.random.normal(k1, (B, N, D), dtype=jnp.float32)
    out1 = jax.block_until_ready(pre_shift_tokens(x1, shifts))
    ref1 = _ref_pre_shift_np(np.asarray(x1), shifts)
    np.testing.assert_allclose(np.asarray(out1), ref1, rtol=1e-6, atol=1e-6)

    # Case 2: lane-aligned segments (fps=128) -> feature-tiled fast path.
    B2, N2, D2 = 2, 16, 384
    shifts2 = (0, 1, -1)
    x2 = jax.random.normal(k2, (B2, N2, D2), dtype=jnp.float32)
    out2 = jax.block_until_ready(pre_shift_tokens(x2, shifts2))
    ref2 = _ref_pre_shift_np(np.asarray(x2), shifts2)
    np.testing.assert_allclose(np.asarray(out2), ref2, rtol=1e-6, atol=1e-6)

    print("KERNEL_OK")
</pallas_src>

<mosaic_0001>
module attributes {stable_mosaic.version = 11 : i64} {
  func.func @_pre_shift_full_kernel(%arg0: i32, %arg1: memref<1x8x32xf32, #tpu.memory_space<vmem>>, %arg2: memref<1x8x32xf32, #tpu.memory_space<vmem>>) attributes {dimension_semantics = [#tpu.dimension_semantics<parallel>], iteration_bounds = array<i64: 2>, scalar_prefetch = 0 : i64, scratch_operands = 0 : i64, tpu.core_type = #tpu.core_type<tc>, window_params = [{transform_indices = @transform_0, window_bounds = array<i64: 1, 8, 32>}, {transform_indices = @transform_1, window_bounds = array<i64: 1, 8, 32>}]} {
    %c0 = arith.constant 0 : index
    %c0_0 = arith.constant 0 : index
    %c0_1 = arith.constant 0 : index
    %0 = vector.load %arg1[%c0, %c0_0, %c0_1] : memref<1x8x32xf32, #tpu.memory_space<vmem>>, vector<1x8x10xf32>
    %1 = vector.shape_cast %0 : vector<1x8x10xf32> to vector<8x10xf32>
    %c0_2 = arith.constant 0 : index
    %c0_3 = arith.constant 0 : index
    %c0_4 = arith.constant 0 : index
    %2 = vector.load %arg2[%c0_2, %c0_3, %c0_4] : memref<1x8x32xf32, #tpu.memory_space<vmem>>, vector<1x8x10xf32>
    %3 = vector.shape_cast %2 : vector<1x8x10xf32> to vector<8x10xf32>
    %4 = vector.shape_cast %1 : vector<8x10xf32> to vector<1x8x10xf32>
    tpu.vector_store %arg2[%c0_2, %c0_3, %c0_4], %4 {strides = array<i32>} : memref<1x8x32xf32, #tpu.memory_space<vmem>>, vector<1x8x10xf32>,
    %cst = arith.constant 0.000000e+00 : f32
    %5 = vector.broadcast %cst : f32 to vector<1x10xf32>
    %c0_5 = arith.constant 0 : index
    %c0_6 = arith.constant 0 : index
    %c10 = arith.constant 10 : index
    %6 = vector.load %arg2[%c0_5, %c0_6, %c10] : memref<1x8x32xf32, #tpu.memory_space<vmem>>, vector<1x1x10xf32>
    %7 = vector.shape_cast %6 : vector<1x1x10xf32> to vector<1x10xf32>
    %8 = vector.shape_cast %5 : vector<1x10xf32> to vector<1x1x10xf32>
    tpu.vector_store %arg2[%c0_5, %c0_6, %c10], %8 {strides = array<i32>} : memref<1x8x32xf32, #tpu.memory_space<vmem>>, vector<1x1x10xf32>,
    %c0_7 = arith.constant 0 : index
    %c0_8 = arith.constant 0 : index
    %c10_9 = arith.constant 10 : index
    %9 = vector.load %arg1[%c0_7, %c0_8, %c10_9] : memref<1x8x32xf32, #tpu.memory_space<vmem>>, vector<1x7x10xf32>
    %10 = vector.shape_cast %9 : vector<1x7x10xf32> to vector<7x10xf32>
    %c0_10 = arith.constant 0 : index
    %c1 = arith.constant 1 : index
    %c10_11 = arith.constant 10 : index
    %11 = vector.load %arg2[%c0_10, %c1, %c10_11] : memref<1x8x32xf32, #tpu.memory_space<vmem>>, vector<1x7x10xf32>
    %12 = vector.shape_cast %11 : vector<1x7x10xf32> to vector<7x10xf32>
    %13 = vector.shape_cast %10 : vector<7x10xf32> to vector<1x7x10xf32>
    tpu.vector_store %arg2[%c0_10, %c1, %c10_11], %13 {strides = array<i32>} : memref<1x8x32xf32, #tpu.memory_space<vmem>>, vector<1x7x10xf32>,
    %c0_12 = arith.constant 0 : index
    %c1_13 = arith.constant 1 : index
    %c20 = arith.constant 20 : index
    %14 = vector.load %arg1[%c0_12, %c1_13, %c20] : memref<1x8x32xf32, #tpu.memory_space<vmem>>, vector<1x7x10xf32>
    %15 = vector.shape_cast %14 : vector<1x7x10xf32> to vector<7x10xf32>
    %c0_14 = arith.constant 0 : index
    %c0_15 = arith.constant 0 : index
    %c20_16 = arith.constant 20 : index
    %16 = vector.load %arg2[%c0_14, %c0_15, %c20_16] : memref<1x8x32xf32, #tpu.memory_space<vmem>>, vector<1x7x10xf32>
    %17 = vector.shape_cast %16 : vector<1x7x10xf32> to vector<7x10xf32>
    %18 = vector.shape_cast %15 : vector<7x10xf32> to vector<1x7x10xf32>
    tpu.vector_store %arg2[%c0_14, %c0_15, %c20_16], %18 {strides = array<i32>} : memref<1x8x32xf32, #tpu.memory_space<vmem>>, vector<1x7x10xf32>,
    %cst_17 = arith.constant 0.000000e+00 : f32
    %19 = vector.broadcast %cst_17 : f32 to vector<1x10xf32>
    %c0_18 = arith.constant 0 : index
    %c7 = arith.constant 7 : index
    %c20_19 = arith.constant 20 : index
    %20 = vector.load %arg2[%c0_18, %c7, %c20_19] : memref<1x8x32xf32, #tpu.memory_space<vmem>>, vector<1x1x10xf32>
    %21 = vector.shape_cast %20 : vector<1x1x10xf32> to vector<1x10xf32>
    %22 = vector.shape_cast %19 : vector<1x10xf32> to vector<1x1x10xf32>
    tpu.vector_store %arg2[%c0_18, %c7, %c20_19], %22 {strides = array<i32>} : memref<1x8x32xf32, #tpu.memory_space<vmem>>, vector<1x1x10xf32>,
    %c0_20 = arith.constant 0 : index
    %c0_21 = arith.constant 0 : index
    %c30 = arith.constant 30 : index
    %23 = vector.load %arg1[%c0_20, %c0_21, %c30] : memref<1x8x32xf32, #tpu.memory_space<vmem>>, vector<1x8x2xf32>
    %24 = vector.shape_cast %23 : vector<1x8x2xf32> to vector<8x2xf32>
    %c0_22 = arith.constant 0 : index
    %c0_23 = arith.constant 0 : index
    %c30_24 = arith.constant 30 : index
    %25 = vector.load %arg2[%c0_22, %c0_23, %c30_24] : memref<1x8x32xf32, #tpu.memory_space<vmem>>, vector<1x8x2xf32>
    %26 = vector.shape_cast %25 : vector<1x8x2xf32> to vector<8x2xf32>
    %27 = vector.shape_cast %24 : vector<8x2xf32> to vector<1x8x2xf32>
    tpu.vector_store %arg2[%c0_22, %c0_23, %c30_24], %27 {strides = array<i32>} : memref<1x8x32xf32, #tpu.memory_space<vmem>>, vector<1x8x2xf32>,
    return
  }
  func.func @transform_0(%arg0: i32) -> (i32, i32, i32) {
    %c0_i32 = arith.constant 0 : i32
    %c0_i32_0 = arith.constant 0 : i32
    %c0_i32_1 = arith.constant 0 : i32
    return %arg0, %c0_i32, %c0_i32_0 : i32, i32, i32
  }
  func.func @transform_1(%arg0: i32) -> (i32, i32, i32) {
    %c0_i32 = arith.constant 0 : i32
    %c0_i32_0 = arith.constant 0 : i32
    %c0_i32_1 = arith.constant 0 : i32
    return %arg0, %c0_i32, %c0_i32_0 : i32, i32, i32
  }
}

</mosaic_0001>

<llo_original>
// kernel: tpu_custom_call.1
$region0: #{tpu_custom_call.1}
  #allocation0 [shape = 'u32[]', space=smem, size = 0x4, offset = 0x4, fixed_abs, tag = 'smem constant byte address 0x4 - core index']
  #allocation1 [shape = 'u32[144,128]{1,0:T(1,128)}', space=vmem, size = 0x12000, scoped, tag = 'internal scratch']
  %s0 = inlined_call_operand.hbm [shape: f32[2,8,32], index: 0, kind: input, shape index: {}]
  %s1 = inlined_call_operand.hbm [shape: f32[2,8,32], index: 1, kind: output, shape index: {}]
  %s2 = sld [smem:[#allocation0]]
  $region41: #{tpu_custom_call.1} parent=0
    _
  %s4 = ssub.s32 1, %s2
  %s5 = scalar_select 0, %s4, %s2
  $region1: #{tpu_custom_call.1} parent=0
    #allocation2 [shape = 'u8[8192]{0}', space=vmem, size = 0x2000, scoped, tag = 'input window, operand 0']
    #allocation3 [shape = 's32[2]{0}', space=sflag, size = 0x8, scoped, tag = 'scoped memory for tpu_custom_call.1']
    #allocation4 [shape = 's32[2]{0}', space=sflag, size = 0x8, scoped, tag = 'scoped memory for tpu_custom_call.1']
    #allocation5 [shape = 'u8[8192]{0}', space=vmem, size = 0x2000, scoped, tag = 'output window, operand 0']
    %6 = vsyncpa [#allocation3], 0
    %s7 = scalar_lea.sflag [#allocation3], 1
    %8 = vsyncpa %s7, 0
    %9 = vsyncpa [#allocation4], 0
    %s10 = scalar_lea.sflag [#allocation4], 1
    %11 = vsyncpa %s10, 0
    loop: start=0, step=1, limit=4
    $region2: #{tpu_custom_call.1} parent=1 // loop_pre_header
      _
    $region3: #{tpu_custom_call.1} parent=1 // loop_header
      %s13 = sphi 0, %s17
      %p14 = scmp.ge.s32.totalorder %s13, 4
      %s23 = sphi 0, %s25
      %s26 = sphi 0, %s23
      %s27 = sphi 0, %s26
      %s43 = sphi 0, %s27
      %s49 = sphi 0, %s51
      %s52 = sphi 0, %s49
      %s53 = sphi 0, %s52
      %s69 = sphi 0, %s53
    $region4: #{tpu_custom_call.1} parent=1 // loop_header_branch
      %16 = sbr.rel (%p14) target = $region8
    $region5: #{tpu_custom_call.1} parent=1 // loop_body
      %s18 = ssub.s32 %s13, 1
      %s19 = ssub.s32 %s13, 2
      %s20 = sadd.s32 %s13, 1
      %s21 = ssub.s32 %s13, %s20
      %p22 = scmp.eq.s32.totalorder %s21, 0
      %s24 = sadd.s32 %s23, 1
      %s25 = scalar_select %p22, %s23, %s24
      %p28 = pneg %p22
      %p29 = scmp.eq.s32.totalorder %s13, 1
      %p30 = por %p28, %p29
      %p31 = scmp.ne.s32.totalorder %s23, %s26
      %p32 = scmp.eq.s32.totalorder %s13, 0
      %p33 = por %p31, %p32
      %p34 = scmp.ne.s32.totalorder %s23, %s26
      %p35 = scmp.eq.s32.totalorder %s18, 1
      %p36 = por %p34, %p35
      %p37 = scmp.ne.s32.totalorder %s26, %s27
      %p38 = scmp.eq.s32.totalorder %s18, 0
      %p39 = por %p37, %p38
      %p40 = scmp.ne.s32.totalorder %s26, %s27
      %p41 = scmp.eq.s32.totalorder %s19, 1
      %p42 = por %p40, %p41
      %p44 = scmp.ne.s32.totalorder %s27, %s43
      %p45 = scmp.eq.s32.totalorder %s19, 0
      %p46 = por %p44, %p45
      %s47 = ssub.s32 %s13, %s20
      %p48 = scmp.eq.s32.totalorder %s47, 0
      %s50 = sadd.s32 %s49, 1
      %s51 = scalar_select %p48, %s49, %s50
      %p54 = pneg %p48
      %p55 = scmp.eq.s32.totalorder %s13, 1
      %p56 = por %p54, %p55
      %p57 = scmp.ne.s32.totalorder %s49, %s52
      %p58 = scmp.eq.s32.totalorder %s13, 0
      %p59 = por %p57, %p58
      %p60 = scmp.ne.s32.totalorder %s49, %s52
      %p61 = scmp.eq.s32.totalorder %s18, 1
      %p62 = por %p60, %p61
      %p63 = scmp.ne.s32.totalorder %s52, %s53
      %p64 = scmp.eq.s32.totalorder %s18, 0
      %p65 = por %p63, %p64
      %p66 = scmp.ne.s32.totalorder %s52, %s53
      %p67 = scmp.eq.s32.totalorder %s19, 1
      %p68 = por %p66, %p67
      %p70 = scmp.ne.s32.totalorder %s53, %s69
      %p71 = scmp.eq.s32.totalorder %s19, 0
      %p72 = por %p70, %p71
      %p73 = scmp.le.s32.totalorder 1, %s13
      %p74 = scmp.lt.s32.totalorder %s13, 3
      %p75 = pnand %p73, %p74
      %p76 = pneg %p75
      // Predicated region
      $region9: #{tpu_custom_call.1} parent=5 // pred_check
        _
      $region10: #{tpu_custom_call.1} parent=5 // pred_check_branch
        %78 = sbr.rel (%p75) target = $region12
      $region11: #{tpu_custom_call.1} parent=5 // pred_region
        %s79 = ssub.s32 %s13, 1
      $region12: #{tpu_custom_call.1} parent=5 // pred_fallthru
        _
      %p80 = scmp.lt.s32.totalorder %s13, 2
      // Predicated region
      $region13: #{tpu_custom_call.1} parent=5 // pred_check
        %p81 = pneg %p80
      $region14: #{tpu_custom_call.1} parent=5 // pred_check_branch
        %83 = sbr.rel (%p81) target = $region16
      $region15: #{tpu_custom_call.1} parent=5 // pred_region
        // Predicated region
        $region17: #{tpu_custom_call.1} parent=15 // pred_check
          %p84 = pneg %p33
        $region18: #{tpu_custom_call.1} parent=15 // pred_check_branch
          %86 = sbr.rel (%p84) target = $region20
        $region19: #{tpu_custom_call.1} parent=15 // pred_region
          %s87 = sand.u32 %s23, 1
          %s88 = scalar_lea.sflag [#allocation3], %s87
          %s89 = sand.u32 %s23, 1
          %s90 = smul.addr %s89, 8
          %s91 = scalar_lea.vmem [#allocation2], %s90
          %s93 = ssub.s32 128, 128
          %94 = vsyncadd %s88, %s93
          %s95 = smul.addr %s13, 128
          %s96 = scalar_lea.hbm %s0, %s95
          %s98 = sshll.u32 %s91, 4
          %s99 = int_to_ptr.vmem [resolvable:$true] %s98
          %101 = dma.hbm_to_vmem [thread:$0]  %s96, 128, %s99, %s88
        $region20: #{tpu_custom_call.1} parent=15 // pred_fallthru
          _
      $region16: #{tpu_custom_call.1} parent=5 // pred_fallthru
        _
      %p102 = scmp.le.s32.totalorder 1, %s13
      %p103 = scmp.lt.s32.totalorder %s13, 3
      %p104 = pnand %p102, %p103
      %p105 = pneg %p104
      // Predicated region
      $region21: #{tpu_custom_call.1} parent=5 // pred_check
        _
      $region22: #{tpu_custom_call.1} parent=5 // pred_check_branch
        %107 = sbr.rel (%p104) target = $region24
      $region23: #{tpu_custom_call.1} parent=5 // pred_region
        %s108 = ssub.s32 %s13, 1
        %s109 = sand.u32 %s26, 1
        %s110 = scalar_lea.sflag [#allocation3], %s109
        %s111 = sand.u32 %s26, 1
        %s112 = smul.addr %s111, 8
        %s113 = scalar_lea.vmem [#allocation2], %s112
        // Predicated region
        $region25: #{tpu_custom_call.1} parent=23 // pred_check
          %p114 = pneg %p39
        $region26: #{tpu_custom_call.1} parent=23 // pred_check_branch
          %116 = sbr.rel (%p114) target = $region28
        $region27: #{tpu_custom_call.1} parent=23 // pred_region
          %117 = dma.done %s110, 128
        $region28: #{tpu_custom_call.1} parent=23 // pred_fallthru
          _
        %s118 = sand.u32 %s26, 1
        %s119 = scalar_lea.sflag [#allocation3], %s118
        %s120 = sand.u32 %s26, 1
        %s121 = smul.addr %s120, 8
        %s122 = scalar_lea.vmem [#allocation2], %s121
        %p123 = pneg %p39
        %p124 = pneg %p36
        %p125 = pneg %p65
        %p126 = pneg %p62
        %s127 = sand.u32 %s52, 1
        %s128 = scalar_lea.sflag [#allocation4], %s127
        %s129 = sand.u32 %s52, 1
        %s130 = smul.addr %s129, 8
        %s131 = scalar_lea.vmem [#allocation5], %s130
        %v132 = vld [vmem:[%s113] sm:$0xff]
        %vm133 = vcmask 80896
        %134 = vst.msk [vmem:[%s131] sm:$0xff] %vm133, %v132
        %vm135 = vcmask 155728
        %136 = vst.msk [vmem:[%s131] sm:$0x1] %vm135, 0.0
        %v137 = vld [vmem:[%s113] sm:$0x7f]
        %vm138 = vcmask 161872
        %139 = vst.msk [vmem:[%s131 + $0x1] sm:$0x7f] %vm138, %v137
        %v140 = vld [vmem:[%s113 + $0x1] sm:$0x7f]
        %vm141 = vcmask 243872
        %142 = vst.msk [vmem:[%s131] sm:$0x7f] %vm141, %v140
        %vm143 = vcmask 237728
        %144 = vst.msk [vmem:[%s131 + $0x7] sm:$0x1] %vm143, 0.0
        %v145 = vld [vmem:[%s113] sm:$0xff]
        %vm146 = vcmask 261360
        %147 = vst.msk [vmem:[%s131] sm:$0xff] %vm146, %v145
        %s148 = sand.u32 %s52, 1
        %s149 = scalar_lea.sflag [#allocation4], %s148
        %s150 = sand.u32 %s52, 1
        %s151 = smul.addr %s150, 8
        %s152 = scalar_lea.vmem [#allocation5], %s151
        // Predicated region
        $region29: #{tpu_custom_call.1} parent=23 // pred_check
          %p153 = pneg %p62
        $region30: #{tpu_custom_call.1} parent=23 // pred_check_branch
          %155 = sbr.rel (%p153) target = $region32
        $region31: #{tpu_custom_call.1} parent=23 // pred_region
          %s157 = ssub.s32 128, 128
          %158 = vsyncadd %s149, %s157
          %s159 = smul.addr %s18, 128
          %s160 = scalar_lea.hbm %s1, %s159
          %s162 = sshll.u32 %s152, 4
          %s163 = int_to_ptr.vmem [resolvable:$true] %s162
          %165 = dma.vmem_to_hbm [thread:$0]  %s163, 128, %s160, %s149
        $region32: #{tpu_custom_call.1} parent=23 // pred_fallthru
          _
      $region24: #{tpu_custom_call.1} parent=5 // pred_fallthru
        _
      %p166 = scmp.le.s32.totalorder 2, %s13
      // Predicated region
      $region33: #{tpu_custom_call.1} parent=5 // pred_check
        %p167 = pneg %p166
      $region34: #{tpu_custom_call.1} parent=5 // pred_check_branch
        %169 = sbr.rel (%p167) target = $region36
      $region35: #{tpu_custom_call.1} parent=5 // pred_region
        %s170 = ssub.s32 %s13, 2
        // Predicated region
        $region37: #{tpu_custom_call.1} parent=35 // pred_check
          %p171 = pneg %p68
        $region38: #{tpu_custom_call.1} parent=35 // pred_check_branch
          %173 = sbr.rel (%p171) target = $region40
        $region39: #{tpu_custom_call.1} parent=35 // pred_region
          %s174 = sand.u32 %s53, 1
          %s175 = scalar_lea.sflag [#allocation4], %s174
          %s176 = sand.u32 %s53, 1
          %s177 = smul.addr %s176, 8
          %s178 = scalar_lea.vmem [#allocation5], %s177
          %179 = dma.done %s175, 128
        $region40: #{tpu_custom_call.1} parent=35 // pred_fallthru
          _
      $region36: #{tpu_custom_call.1} parent=5 // pred_fallthru
        _
    $region6: #{tpu_custom_call.1} parent=1 // loop_footer
      %s17 = sadd.s32 1, %s13
    $region7: #{tpu_custom_call.1} parent=1 // loop_footer_branch
      %12 = sbr.rel target = $region3
    $region8: #{tpu_custom_call.1} parent=1 // loop_exit
      _
    %180 = vsyncpa [#allocation3], 1
    %s181 = scalar_lea.sflag [#allocation3], 1
    %182 = vsyncpa %s181, 1
    %183 = vsyncpa [#allocation4], 1
    %s184 = scalar_lea.sflag [#allocation4], 1
    %185 = vsyncpa %s184, 1

</llo_original>
